<compile_context>
chip_gen: v6e
topology: v6e:2x2x1
jax: 0.10.0
libtpu: 0.0.40
codegen_flags: <defaults>
</compile_context>

<pallas_src>
import jax
import jax.numpy as jnp
from jax.experimental import pallas as pl
from jax.experimental.pallas import tpu as pltpu


def _outconv_kernel(w_ref, b_ref, x_ref, o_ref):
    """1x1 conv on one (C_in, TILE_HW) pixel slab.

    w_ref : SMEM (C_out*C_in,)  -- row-major (C_out, C_in) weights
    b_ref : SMEM (C_out,)
    x_ref : VMEM (C_in, TILE_HW)
    o_ref : VMEM (C_out, TILE_HW)
    """
    c_in, tile = x_ref.shape
    c_out = o_ref.shape[0]

    x = x_ref[...].astype(jnp.float32)                    # (C_in, TILE)
    rows = []
    for co in range(c_out):
        acc = jnp.full((1, tile), b_ref[co], dtype=jnp.float32)
        for ci in range(c_in):
            # scalar (SMEM) * vector (VMEM) broadcast MAC on the VPU
            acc = acc + w_ref[co * c_in + ci] * x[ci:ci + 1, :]
        rows.append(acc)
    o_ref[...] = jnp.concatenate(rows, axis=0).astype(o_ref.dtype)


def _round_up(x, m):
    return (x + m - 1) // m * m


@jax.jit
def out_conv(x_nchw, weight, bias):
    """1x1 Conv2d (OutConv) forward.

    x_nchw : (N, C_in, H, W)
    weight : (C_out, C_in, 1, 1)  -- nn.Conv2d(kernel_size=1).weight layout
    bias   : (C_out,)
    returns: (N, C_out, H, W)
    """
    N, C_in, H, W = x_nchw.shape
    C_out = weight.shape[0]
    HW = H * W

    # Large, lane-dense pixel tile (multiple of 128).  (C_in + C_out) * tile
    # * 4B * 2 buffers is a few hundred KiB at most — fits every generation's
    # scoped VMEM (incl. v7x's 64 MiB physical) with huge headroom.
    MAX_TILE = 8192
    tile_hw = min(MAX_TILE, _round_up(HW, 128))
    HW_pad = _round_up(HW, tile_hw)

    # Pure reshape (no transpose): NCHW -> (N, C_in, H*W); pad pixels if needed.
    x_flat = x_nchw.reshape(N, C_in, HW)
    if HW_pad != HW:
        x_flat = jnp.pad(x_flat, ((0, 0), (0, 0), (0, HW_pad - HW)))

    w_flat = weight.reshape(C_out * C_in).astype(jnp.float32)   # SMEM scalars
    b_vec = bias.reshape(C_out).astype(jnp.float32)             # SMEM scalars

    grid = (N, HW_pad // tile_hw)

    itemsize = jnp.dtype(x_flat.dtype).itemsize
    cost = pl.CostEstimate(
        flops=2 * N * HW * C_in * C_out,
        transcendentals=0,
        bytes_accessed=N * HW_pad * (C_in + C_out) * itemsize
        + (w_flat.size + b_vec.size) * 4,
    )

    y_flat = pl.pallas_call(
        _outconv_kernel,
        out_shape=jax.ShapeDtypeStruct((N, C_out, HW_pad), x_nchw.dtype),
        grid=grid,
        in_specs=[
            pl.BlockSpec(memory_space=pltpu.MemorySpace.SMEM),   # weights (resident)
            pl.BlockSpec(memory_space=pltpu.MemorySpace.SMEM),   # bias    (resident)
            pl.BlockSpec((None, C_in, tile_hw), lambda n, t: (n, 0, t)),
        ],
        out_specs=pl.BlockSpec((None, C_out, tile_hw), lambda n, t: (n, 0, t)),
        compiler_params=pltpu.CompilerParams(
            dimension_semantics=("parallel", "parallel"),
        ),
        cost_estimate=cost,
    )(w_flat, b_vec, x_flat)

    # Drop pixel padding, restore NCHW (pure reshape, no transpose).
    return y_flat[:, :, :HW].reshape(N, C_out, H, W)


if __name__ == "__main__":
    # Module config: OutConv(in_channels=4, out_channels=3)
    N, C_in, H, W = 2, 4, 16, 16
    C_out = 3

    key = jax.random.PRNGKey(0)
    kx, kw, kb = jax.random.split(key, 3)

    x = jax.random.normal(kx, (N, C_in, H, W), dtype=jnp.float32)
    weight = jax.random.normal(kw, (C_out, C_in, 1, 1), dtype=jnp.float32) * 0.1
    bias = jax.random.normal(kb, (C_out,), dtype=jnp.float32) * 0.1

    y = out_conv(x, weight, bias)
    y = jax.block_until_ready(y)

    # Plain-JAX reference check of the 1x1 conv semantics.
    ref = jnp.einsum("nchw,oc->nohw", x, weight.reshape(C_out, C_in)) \
        + bias[None, :, None, None]
    assert y.shape == (N, C_out, H, W)
    assert jnp.allclose(y, ref, atol=1e-5, rtol=1e-5)

    print("KERNEL_OK")
</pallas_src>

<mosaic_0001>
module attributes {stable_mosaic.version = 11 : i64} {
  func.func @_outconv_kernel(%arg0: i32, %arg1: i32, %arg2: memref<12xf32, #tpu.memory_space<smem>>, %arg3: memref<3xf32, #tpu.memory_space<smem>>, %arg4: memref<1x4x256xf32, #tpu.memory_space<vmem>>, %arg5: memref<1x3x256xf32, #tpu.memory_space<vmem>>) attributes {dimension_semantics = [#tpu.dimension_semantics<parallel>, #tpu.dimension_semantics<parallel>], iteration_bounds = array<i64: 2, 1>, scalar_prefetch = 0 : i64, scratch_operands = 0 : i64, tpu.core_type = #tpu.core_type<tc>, window_params = [{transform_indices = @transform_0, window_bounds = array<i64: 12>}, {transform_indices = @transform_1, window_bounds = array<i64: 3>}, {transform_indices = @transform_2, window_bounds = array<i64: 1, 4, 256>}, {transform_indices = @transform_3, window_bounds = array<i64: 1, 3, 256>}]} {
    %c0 = arith.constant 0 : index
    %c0_0 = arith.constant 0 : index
    %c0_1 = arith.constant 0 : index
    %0 = vector.load %arg4[%c0, %c0_0, %c0_1] : memref<1x4x256xf32, #tpu.memory_space<vmem>>, vector<1x4x256xf32>
    %1 = vector.shape_cast %0 : vector<1x4x256xf32> to vector<4x256xf32>
    %c0_2 = arith.constant 0 : index
    %2 = memref.load %arg3[%c0_2] : memref<3xf32, #tpu.memory_space<smem>>
    %3 = vector.broadcast %2 : f32 to vector<1x256xf32>
    %c0_3 = arith.constant 0 : index
    %4 = memref.load %arg2[%c0_3] : memref<12xf32, #tpu.memory_space<smem>>
    %5 = vector.extract_strided_slice %1 {offsets = [0, 0], sizes = [1, 256], strides = [1, 1]} : vector<4x256xf32> to vector<1x256xf32>
    %6 = vector.broadcast %4 : f32 to vector<1x256xf32>
    %7 = arith.mulf %6, %5 : vector<1x256xf32>
    %8 = arith.addf %3, %7 : vector<1x256xf32>
    %c1 = arith.constant 1 : index
    %9 = memref.load %arg2[%c1] : memref<12xf32, #tpu.memory_space<smem>>
    %10 = vector.extract_strided_slice %1 {offsets = [1, 0], sizes = [1, 256], strides = [1, 1]} : vector<4x256xf32> to vector<1x256xf32>
    %11 = vector.broadcast %9 : f32 to vector<1x256xf32>
    %12 = arith.mulf %11, %10 : vector<1x256xf32>
    %13 = arith.addf %8, %12 : vector<1x256xf32>
    %c2 = arith.constant 2 : index
    %14 = memref.load %arg2[%c2] : memref<12xf32, #tpu.memory_space<smem>>
    %15 = vector.extract_strided_slice %1 {offsets = [2, 0], sizes = [1, 256], strides = [1, 1]} : vector<4x256xf32> to vector<1x256xf32>
    %16 = vector.broadcast %14 : f32 to vector<1x256xf32>
    %17 = arith.mulf %16, %15 : vector<1x256xf32>
    %18 = arith.addf %13, %17 : vector<1x256xf32>
    %c3 = arith.constant 3 : index
    %19 = memref.load %arg2[%c3] : memref<12xf32, #tpu.memory_space<smem>>
    %20 = vector.extract_strided_slice %1 {offsets = [3, 0], sizes = [1, 256], strides = [1, 1]} : vector<4x256xf32> to vector<1x256xf32>
    %21 = vector.broadcast %19 : f32 to vector<1x256xf32>
    %22 = arith.mulf %21, %20 : vector<1x256xf32>
    %23 = arith.addf %18, %22 : vector<1x256xf32>
    %c1_4 = arith.constant 1 : index
    %24 = memref.load %arg3[%c1_4] : memref<3xf32, #tpu.memory_space<smem>>
    %25 = vector.broadcast %24 : f32 to vector<1x256xf32>
    %c4 = arith.constant 4 : index
    %26 = memref.load %arg2[%c4] : memref<12xf32, #tpu.memory_space<smem>>
    %27 = vector.extract_strided_slice %1 {offsets = [0, 0], sizes = [1, 256], strides = [1, 1]} : vector<4x256xf32> to vector<1x256xf32>
    %28 = vector.broadcast %26 : f32 to vector<1x256xf32>
    %29 = arith.mulf %28, %27 : vector<1x256xf32>
    %30 = arith.addf %25, %29 : vector<1x256xf32>
    %c5 = arith.constant 5 : index
    %31 = memref.load %arg2[%c5] : memref<12xf32, #tpu.memory_space<smem>>
    %32 = vector.extract_strided_slice %1 {offsets = [1, 0], sizes = [1, 256], strides = [1, 1]} : vector<4x256xf32> to vector<1x256xf32>
    %33 = vector.broadcast %31 : f32 to vector<1x256xf32>
    %34 = arith.mulf %33, %32 : vector<1x256xf32>
    %35 = arith.addf %30, %34 : vector<1x256xf32>
    %c6 = arith.constant 6 : index
    %36 = memref.load %arg2[%c6] : memref<12xf32, #tpu.memory_space<smem>>
    %37 = vector.extract_strided_slice %1 {offsets = [2, 0], sizes = [1, 256], strides = [1, 1]} : vector<4x256xf32> to vector<1x256xf32>
    %38 = vector.broadcast %36 : f32 to vector<1x256xf32>
    %39 = arith.mulf %38, %37 : vector<1x256xf32>
    %40 = arith.addf %35, %39 : vector<1x256xf32>
    %c7 = arith.constant 7 : index
    %41 = memref.load %arg2[%c7] : memref<12xf32, #tpu.memory_space<smem>>
    %42 = vector.extract_strided_slice %1 {offsets = [3, 0], sizes = [1, 256], strides = [1, 1]} : vector<4x256xf32> to vector<1x256xf32>
    %43 = vector.broadcast %41 : f32 to vector<1x256xf32>
    %44 = arith.mulf %43, %42 : vector<1x256xf32>
    %45 = arith.addf %40, %44 : vector<1x256xf32>
    %c2_5 = arith.constant 2 : index
    %46 = memref.load %arg3[%c2_5] : memref<3xf32, #tpu.memory_space<smem>>
    %47 = vector.broadcast %46 : f32 to vector<1x256xf32>
    %c8 = arith.constant 8 : index
    %48 = memref.load %arg2[%c8] : memref<12xf32, #tpu.memory_space<smem>>
    %49 = vector.extract_strided_slice %1 {offsets = [0, 0], sizes = [1, 256], strides = [1, 1]} : vector<4x256xf32> to vector<1x256xf32>
    %50 = vector.broadcast %48 : f32 to vector<1x256xf32>
    %51 = arith.mulf %50, %49 : vector<1x256xf32>
    %52 = arith.addf %47, %51 : vector<1x256xf32>
    %c9 = arith.constant 9 : index
    %53 = memref.load %arg2[%c9] : memref<12xf32, #tpu.memory_space<smem>>
    %54 = vector.extract_strided_slice %1 {offsets = [1, 0], sizes = [1, 256], strides = [1, 1]} : vector<4x256xf32> to vector<1x256xf32>
    %55 = vector.broadcast %53 : f32 to vector<1x256xf32>
    %56 = arith.mulf %55, %54 : vector<1x256xf32>
    %57 = arith.addf %52, %56 : vector<1x256xf32>
    %c10 = arith.constant 10 : index
    %58 = memref.load %arg2[%c10] : memref<12xf32, #tpu.memory_space<smem>>
    %59 = vector.extract_strided_slice %1 {offsets = [2, 0], sizes = [1, 256], strides = [1, 1]} : vector<4x256xf32> to vector<1x256xf32>
    %60 = vector.broadcast %58 : f32 to vector<1x256xf32>
    %61 = arith.mulf %60, %59 : vector<1x256xf32>
    %62 = arith.addf %57, %61 : vector<1x256xf32>
    %c11 = arith.constant 11 : index
    %63 = memref.load %arg2[%c11] : memref<12xf32, #tpu.memory_space<smem>>
    %64 = vector.extract_strided_slice %1 {offsets = [3, 0], sizes = [1, 256], strides = [1, 1]} : vector<4x256xf32> to vector<1x256xf32>
    %65 = vector.broadcast %63 : f32 to vector<1x256xf32>
    %66 = arith.mulf %65, %64 : vector<1x256xf32>
    %67 = arith.addf %62, %66 : vector<1x256xf32>
    %68 = tpu.concatenate %23, %45, %67 in 0 : vector<1x256xf32>, vector<1x256xf32>, vector<1x256xf32> -> vector<3x256xf32>
    %c0_6 = arith.constant 0 : index
    %c0_7 = arith.constant 0 : index
    %c0_8 = arith.constant 0 : index
    %69 = vector.load %arg5[%c0_6, %c0_7, %c0_8] : memref<1x3x256xf32, #tpu.memory_space<vmem>>, vector<1x3x256xf32>
    %70 = vector.shape_cast %69 : vector<1x3x256xf32> to vector<3x256xf32>
    %71 = vector.shape_cast %68 : vector<3x256xf32> to vector<1x3x256xf32>
    tpu.vector_store %arg5[%c0_6, %c0_7, %c0_8], %71 {strides = array<i32>} : memref<1x3x256xf32, #tpu.memory_space<vmem>>, vector<1x3x256xf32>,
    return
  }
  func.func @transform_0(%arg0: i32, %arg1: i32) -> i32 {
    %c0_i32 = arith.constant 0 : i32
    %c0_i32_0 = arith.constant 0 : i32
    return %c0_i32 : i32
  }
  func.func @transform_1(%arg0: i32, %arg1: i32) -> i32 {
    %c0_i32 = arith.constant 0 : i32
    %c0_i32_0 = arith.constant 0 : i32
    return %c0_i32 : i32
  }
  func.func @transform_2(%arg0: i32, %arg1: i32) -> (i32, i32, i32) {
    %c0_i32 = arith.constant 0 : i32
    %c0_i32_0 = arith.constant 0 : i32
    return %arg0, %c0_i32, %arg1 : i32, i32, i32
  }
  func.func @transform_3(%arg0: i32, %arg1: i32) -> (i32, i32, i32) {
    %c0_i32 = arith.constant 0 : i32
    %c0_i32_0 = arith.constant 0 : i32
    return %arg0, %c0_i32, %arg1 : i32, i32, i32
  }
}

</mosaic_0001>

<llo_original>
// kernel: out_conv.1
$region0: #{out_conv.1}
  #allocation0 [shape = 'u32[]', space=smem, size = 0x4, offset = 0x4, fixed_abs, tag = 'smem constant byte address 0x4 - core index']
  #allocation1 [shape = 'u32[144,128]{1,0:T(1,128)}', space=vmem, size = 0x12000, scoped, tag = 'internal scratch']
  %s0 = inlined_call_operand.vmem [shape: f32[12], index: 0, kind: input, shape index: {}]
  %s1 = inlined_call_operand.vmem [shape: f32[3], index: 1, kind: input, shape index: {}]
  %s2 = inlined_call_operand.vmem [shape: f32[2,4,256], index: 2, kind: input, shape index: {}]
  %s3 = inlined_call_operand.vmem [shape: f32[2,3,256], index: 3, kind: output, shape index: {}]
  %s4 = sld [smem:[#allocation0]]
  $region53: #{out_conv.1} parent=0
    _
  %s6 = ssub.s32 1, %s4
  %s7 = scalar_select 0, %s6, %s4
  $region1: #{out_conv.1} parent=0
    #allocation2 [shape = 'u8[512]{0}', space=smem, size = 0x200, scoped, tag = 'input window, operand 0, single buffered']
    #allocation3 [shape = 's32[2]{0}', space=sflag, size = 0x8, scoped, tag = 'scoped memory for out_conv.1']
    #allocation4 [shape = 'u8[512]{0}', space=smem, size = 0x200, scoped, tag = 'input window, operand 1, single buffered']
    #allocation5 [shape = 's32[1]{0}', space=sflag, size = 0x4, scoped, tag = 'scoped memory for out_conv.1']
    %8 = vsyncpa [#allocation3], 0
    %9 = vsyncpa [#allocation5], 0
    loop: start=0, step=1, limit=4
    $region2: #{out_conv.1} parent=1 // loop_pre_header
      _
    $region3: #{out_conv.1} parent=1 // loop_header
      %s11 = sphi 0, %s15
      %p12 = scmp.ge.s32.totalorder %s11, 4
      %s18 = sphi 0, %s30
      %s19 = sphi 0, %s26
      %s20 = sphi 0, %s18
      %s21 = sphi 0, %s19
      %s22 = sphi 0, %s20
      %s23 = sphi 0, %s21
      %s31 = sphi 0, %s31
      %s33 = sphi 0, %s31
      %s34 = sphi 0, %s33
      %s48 = sphi 0, %s34
      %s52 = sphi 0, %s52
      %s54 = sphi 0, %s52
      %s55 = sphi 0, %s54
      %s69 = sphi 0, %s55
      %s77 = sphi 0, %s79
      %s80 = sphi 0, %s77
      %s81 = sphi 0, %s80
      %s97 = sphi 0, %s81
      %s105 = sphi 0, %s107
      %s108 = sphi 0, %s105
      %s109 = sphi 0, %s108
      %s125 = sphi 0, %s109
    $region4: #{out_conv.1} parent=1 // loop_header_branch
      %14 = sbr.rel (%p12) target = $region8
    $region5: #{out_conv.1} parent=1 // loop_body
      %s16 = ssub.s32 %s11, 1
      %s17 = ssub.s32 %s11, 2
      %s24 = sadd.s32 1, %s19
      %p25 = scmp.ge.s32.totalorder %s24, 1
      %s26 = scalar_select %p25, 0, %s24
      %s27 = sadd.s32 1, %s18
      %s28 = scalar_select %p25, %s27, %s18
      %p29 = scmp.ge.s32.totalorder %s28, 2
      %s30 = scalar_select %p29, 0, %s28
      %s32 = sadd.s32 %s31, 1
      %p35 = scmp.eq.s32.totalorder %s11, 1
      %p36 = scmp.ne.s32.totalorder %s31, %s33
      %p37 = scmp.eq.s32.totalorder %s11, 0
      %p38 = por %p36, %p37
      %p39 = scmp.ne.s32.totalorder %s31, %s33
      %p40 = scmp.eq.s32.totalorder %s16, 1
      %p41 = por %p39, %p40
      %p42 = scmp.ne.s32.totalorder %s33, %s34
      %p43 = scmp.eq.s32.totalorder %s16, 0
      %p44 = por %p42, %p43
      %p45 = scmp.ne.s32.totalorder %s33, %s34
      %p46 = scmp.eq.s32.totalorder %s17, 1
      %p47 = por %p45, %p46
      %p49 = scmp.ne.s32.totalorder %s34, %s48
      %p50 = scmp.eq.s32.totalorder %s17, 0
      %p51 = por %p49, %p50
      %s53 = sadd.s32 %s52, 1
      %p56 = scmp.eq.s32.totalorder %s11, 1
      %p57 = scmp.ne.s32.totalorder %s52, %s54
      %p58 = scmp.eq.s32.totalorder %s11, 0
      %p59 = por %p57, %p58
      %p60 = scmp.ne.s32.totalorder %s52, %s54
      %p61 = scmp.eq.s32.totalorder %s16, 1
      %p62 = por %p60, %p61
      %p63 = scmp.ne.s32.totalorder %s54, %s55
      %p64 = scmp.eq.s32.totalorder %s16, 0
      %p65 = por %p63, %p64
      %p66 = scmp.ne.s32.totalorder %s54, %s55
      %p67 = scmp.eq.s32.totalorder %s17, 1
      %p68 = por %p66, %p67
      %p70 = scmp.ne.s32.totalorder %s55, %s69
      %p71 = scmp.eq.s32.totalorder %s17, 0
      %p72 = por %p70, %p71
      %s73 = ssub.s32 %s18, %s30
      %s74 = ssub.s32 %s19, %s26
      %s75 = sor.u32 %s73, %s74
      %p76 = scmp.eq.s32.totalorder %s75, 0
      %s78 = sadd.s32 %s77, 1
      %s79 = scalar_select %p76, %s77, %s78
      %p82 = pneg %p76
      %p83 = scmp.eq.s32.totalorder %s11, 1
      %p84 = por %p82, %p83
      %p85 = scmp.ne.s32.totalorder %s77, %s80
      %p86 = scmp.eq.s32.totalorder %s11, 0
      %p87 = por %p85, %p86
      %p88 = scmp.ne.s32.totalorder %s77, %s80
      %p89 = scmp.eq.s32.totalorder %s16, 1
      %p90 = por %p88, %p89
      %p91 = scmp.ne.s32.totalorder %s80, %s81
      %p92 = scmp.eq.s32.totalorder %s16, 0
      %p93 = por %p91, %p92
      %p94 = scmp.ne.s32.totalorder %s80, %s81
      %p95 = scmp.eq.s32.totalorder %s17, 1
      %p96 = por %p94, %p95
      %p98 = scmp.ne.s32.totalorder %s81, %s97
      %p99 = scmp.eq.s32.totalorder %s17, 0
      %p100 = por %p98, %p99
      %s101 = ssub.s32 %s18, %s30
      %s102 = ssub.s32 %s19, %s26
      %s103 = sor.u32 %s101, %s102
      %p104 = scmp.eq.s32.totalorder %s103, 0
      %s106 = sadd.s32 %s105, 1
      %s107 = scalar_select %p104, %s105, %s106
      %p110 = pneg %p104
      %p111 = scmp.eq.s32.totalorder %s11, 1
      %p112 = por %p110, %p111
      %p113 = scmp.ne.s32.totalorder %s105, %s108
      %p114 = scmp.eq.s32.totalorder %s11, 0
      %p115 = por %p113, %p114
      %p116 = scmp.ne.s32.totalorder %s105, %s108
      %p117 = scmp.eq.s32.totalorder %s16, 1
      %p118 = por %p116, %p117
      %p119 = scmp.ne.s32.totalorder %s108, %s109
      %p120 = scmp.eq.s32.totalorder %s16, 0
      %p121 = por %p119, %p120
      %p122 = scmp.ne.s32.totalorder %s108, %s109
      %p123 = scmp.eq.s32.totalorder %s17, 1
      %p124 = por %p122, %p123
      %p126 = scmp.ne.s32.totalorder %s109, %s125
      %p127 = scmp.eq.s32.totalorder %s17, 0
      %p128 = por %p126, %p127
      %p129 = scmp.le.s32.totalorder 1, %s11
      %p130 = scmp.lt.s32.totalorder %s11, 3
      %p131 = pnand %p129, %p130
      %p132 = pneg %p131
      // Predicated region
      $region9: #{out_conv.1} parent=5 // pred_check
        _
      $region10: #{out_conv.1} parent=5 // pred_check_branch
        %134 = sbr.rel (%p131) target = $region12
      $region11: #{out_conv.1} parent=5 // pred_region
        %s135 = ssub.s32 %s11, 1
        // Predicated region
        $region13: #{out_conv.1} parent=11 // pred_check
          %p136 = pneg %p44
        $region14: #{out_conv.1} parent=11 // pred_check_branch
          %138 = sbr.rel (%p136) target = $region16
        $region15: #{out_conv.1} parent=11 // pred_region
          %s140 = ssub.s32 16, 16
          %141 = vsyncadd [#allocation3], %s140
          %s143 = sshll.u32 %s0, 4
          %s144 = int_to_ptr.vmem [resolvable:$true] %s143
          %146 = dma.vmem_to_smem %s144, 16, [#allocation2], [#allocation3]
        $region16: #{out_conv.1} parent=11 // pred_fallthru
          _
        // Predicated region
        $region17: #{out_conv.1} parent=11 // pred_check
          %p147 = pneg %p65
        $region18: #{out_conv.1} parent=11 // pred_check_branch
          %149 = sbr.rel (%p147) target = $region20
        $region19: #{out_conv.1} parent=11 // pred_region
          %s151 = ssub.s32 16, 16
          %152 = vsyncadd [#allocation5], %s151
          %s154 = sshll.u32 %s1, 4
          %s155 = int_to_ptr.vmem [resolvable:$true] %s154
          %157 = dma.vmem_to_smem %s155, 16, [#allocation4], [#allocation5]
        $region20: #{out_conv.1} parent=11 // pred_fallthru
          _
      $region12: #{out_conv.1} parent=5 // pred_fallthru
        _
      %p158 = scmp.lt.s32.totalorder %s11, 2
      // Predicated region
      $region21: #{out_conv.1} parent=5 // pred_check
        %p159 = pneg %p158
      $region22: #{out_conv.1} parent=5 // pred_check_branch
        %161 = sbr.rel (%p159) target = $region24
      $region23: #{out_conv.1} parent=5 // pred_region
        // Predicated region
        $region25: #{out_conv.1} parent=23 // pred_check
          %p162 = pneg %p87
        $region26: #{out_conv.1} parent=23 // pred_check_branch
          %164 = sbr.rel (%p162) target = $region28
        $region27: #{out_conv.1} parent=23 // pred_region
          %s165 = smul.u32 2, %s19
          %p166 = scmp.lt.s32.totalorder %s18, 1
          %s167 = scalar_select %p166, %s18, 1
          %p168 = scmp.lt.s32.totalorder %s165, 1
          %s169 = scalar_select %p168, %s165, 1
          %s170 = smul.addr %s167, 2
          %s171 = sadd.s32 %s169, %s170
          %s172 = smul.addr %s171, 4
          %s173 = scalar_lea.vmem %s2, %s172
          %s174 = smul.u32 2, %s19
        $region28: #{out_conv.1} parent=23 // pred_fallthru
          _
      $region24: #{out_conv.1} parent=5 // pred_fallthru
        _
      %p175 = scmp.le.s32.totalorder 1, %s11
      %p176 = scmp.lt.s32.totalorder %s11, 3
      %p177 = pnand %p175, %p176
      %p178 = pneg %p177
      // Predicated region
      $region29: #{out_conv.1} parent=5 // pred_check
        _
      $region30: #{out_conv.1} parent=5 // pred_check_branch
        %180 = sbr.rel (%p177) target = $region32
      $region31: #{out_conv.1} parent=5 // pred_region
        %s181 = ssub.s32 %s11, 1
        // Predicated region
        $region33: #{out_conv.1} parent=31 // pred_check
          %p182 = pneg %p44
        $region34: #{out_conv.1} parent=31 // pred_check_branch
          %184 = sbr.rel (%p182) target = $region36
        $region35: #{out_conv.1} parent=31 // pred_region
          %185 = dma.done [#allocation3], 16
        $region36: #{out_conv.1} parent=31 // pred_fallthru
          _
        // Predicated region
        $region37: #{out_conv.1} parent=31 // pred_check
          %p186 = pneg %p65
        $region38: #{out_conv.1} parent=31 // pred_check_branch
          %188 = sbr.rel (%p186) target = $region40
        $region39: #{out_conv.1} parent=31 // pred_region
          %189 = dma.done [#allocation5], 16
        $region40: #{out_conv.1} parent=31 // pred_fallthru
          _
        %190 = sfence
        %p191 = pneg %p44
        %p192 = pneg %p41
        %p193 = pneg %p65
        %p194 = pneg %p62
        %s195 = smul.u32 2, %s21
        %p196 = scmp.lt.s32.totalorder %s20, 1
        %s197 = scalar_select %p196, %s20, 1
        %p198 = scmp.lt.s32.totalorder %s195, 1
        %s199 = scalar_select %p198, %s195, 1
        %s200 = smul.addr %s197, 2
        %s201 = sadd.s32 %s199, %s200
        %s202 = smul.addr %s201, 4
        %s203 = scalar_lea.vmem %s2, %s202
        %p204 = pneg %p93
        %p205 = pneg %p90
        %p206 = pneg %p121
        %p207 = pneg %p118
        %s208 = smul.u32 2, %s21
        %p209 = scmp.lt.s32.totalorder %s20, 1
        %s210 = scalar_select %p209, %s20, 1
        %p211 = scmp.lt.s32.totalorder %s208, 1
        %s212 = scalar_select %p211, %s208, 1
        %s213 = smul.addr %s210, 2
        %s214 = sadd.s32 %s212, %s213
        %s215 = smul.addr %s214, 4
        %s216 = scalar_lea.vmem %s3, %s215
        %s217 = smul.u32 2, %s21
        %p218 = scmp.lt.s32.totalorder %s20, 1
        %s219 = scalar_select %p218, %s20, 1
        %p220 = scmp.lt.s32.totalorder %s217, 1
        %s221 = scalar_select %p220, %s217, 1
        %s222 = smul.addr %s219, 2
        %s223 = sadd.s32 %s221, %s222
        %s224 = smul.addr %s223, 4
        %s225 = scalar_lea.vmem %s2, %s224
        %s226 = smul.u32 2, %s21
        %s227 = smul.u32 2, %s21
        %p228 = scmp.lt.s32.totalorder %s20, 1
        %s229 = scalar_select %p228, %s20, 1
        %p230 = scmp.lt.s32.totalorder %s227, 1
        %s231 = scalar_select %p230, %s227, 1
        %s232 = smul.addr %s229, 2
        %s233 = sadd.s32 %s231, %s232
        %s234 = smul.addr %s233, 4
        %s235 = scalar_lea.vmem %s3, %s234
        %s236 = smul.u32 2, %s21
        %v237 = vld [vmem:[%s225] sm:$0xff]
        %s238 = sld [smem:[#allocation4]]
        %v239 = vstv %s238
        %s240 = sld [smem:[#allocation2]]
        %v241 = vstv %s240
        %v242 = vmul.f32 %v241, %v237
        %v243 = vadd.f32 %v239, %v242
        %s244 = sld [smem:[#allocation2 + $0x1]]
        %v245 = vstv %s244
        %v246 = vmul.f32 %v245, %v237
        %v248 = vrot.slane %v246, 5
        %v249 = vrot.slane %v248, 4
        %v251 = vadd.f32 %v243, %v249
        %s252 = sld [smem:[#allocation2 + $0x2]]
        %v253 = vstv %s252
        %v254 = vmul.f32 %v253, %v237
        %v256 = vrot.slane %v254, 6
        %v257 = vrot.slane %v256, 4
        %v259 = vadd.f32 %v251, %v257
        %s260 = sld [smem:[#allocation2 + $0x3]]
        %v261 = vstv %s260
        %v262 = vmul.f32 %v261, %v237
        %v264 = vrot.slane %v262, 7
        %v265 = vrot.slane %v264, 4
        %v267 = vadd.f32 %v259, %v265
        %s268 = sld [smem:[#allocation4 + $0x1]]
        %v269 = vstv %s268
        %s270 = sld [smem:[#allocation2 + $0x4]]
        %v271 = vstv %s270
        %v272 = vmul.f32 %v271, %v237
        %v273 = vadd.f32 %v269, %v272
        %s274 = sld [smem:[#allocation2 + $0x5]]
        %v275 = vstv %s274
        %v276 = vmul.f32 %v275, %v237
        %v278 = vrot.slane %v276, 5
        %v279 = vrot.slane %v278, 4
        %v281 = vadd.f32 %v273, %v279
        %s282 = sld [smem:[#allocation2 + $0x6]]
        %v283 = vstv %s282
        %v284 = vmul.f32 %v283, %v237
        %v286 = vrot.slane %v284, 6
        %v287 = vrot.slane %v286, 4
        %v289 = vadd.f32 %v281, %v287
        %s290 = sld [smem:[#allocation2 + $0x7]]
        %v291 = vstv %s290
        %v292 = vmul.f32 %v291, %v237
        %v294 = vrot.slane %v292, 7
        %v295 = vrot.slane %v294, 4
        %v297 = vadd.f32 %v289, %v295
        %s298 = sld [smem:[#allocation4 + $0x2]]
        %v299 = vstv %s298
        %s300 = sld [smem:[#allocation2 + $0x8]]
        %v301 = vstv %s300
        %v302 = vmul.f32 %v301, %v237
        %v303 = vadd.f32 %v299, %v302
        %s304 = sld [smem:[#allocation2 + $0x9]]
        %v305 = vstv %s304
        %v306 = vmul.f32 %v305, %v237
        %v308 = vrot.slane %v306, 5
        %v309 = vrot.slane %v308, 4
        %v311 = vadd.f32 %v303, %v309
        %s312 = sld [smem:[#allocation2 + $0xa]]
        %v313 = vstv %s312
        %v314 = vmul.f32 %v313, %v237
        %v316 = vrot.slane %v314, 6
        %v317 = vrot.slane %v316, 4
        %v319 = vadd.f32 %v311, %v317
        %s320 = sld [smem:[#allocation2 + $0xb]]
        %v321 = vstv %s320
        %v322 = vmul.f32 %v321, %v237
        %v324 = vrot.slane %v322, 7
        %v325 = vrot.slane %v324, 4
        %v327 = vadd.f32 %v319, %v325
        %v329 = vlaneseq
        %v330 = vshrl.u32 %v329, 7
        %v331 = vsub.s32 0, %v330
        %v332 = vrot.slane %v267, %v331
        %v333 = vlaneseq
        %v334 = vshrl.u32 %v333, 7
        %v335 = vsub.s32 4, %v334
        %v336 = vrot.slane %v267, %v335
        %v340 = vlaneseq
        %v341 = vshrl.u32 %v340, 7
        %v342 = vsub.s32 0, %v341
        %v343 = vrot.slane %v297, %v342
        %v344 = vlaneseq
        %v345 = vshrl.u32 %v344, 7
        %v346 = vsub.s32 4, %v345
        %v347 = vrot.slane %v297, %v346
        %v351 = vlaneseq
        %v352 = vshrl.u32 %v351, 7
        %v353 = vsub.s32 0, %v352
        %v354 = vrot.slane %v327, %v353
        %v355 = vlaneseq
        %v356 = vshrl.u32 %v355, 7
        %v357 = vsub.s32 4, %v356
        %v358 = vrot.slane %v327, %v357
        %vm361 = vcmask 1040384
        %v362 = vsel %vm361, %v332, %v343
        %v363 = vsel %vm361, %v336, %v347
        %vm364 = vcmask 1041408
        %v365 = vsel %vm364, %v362, %v354
        %v366 = vsel %vm364, %v363, %v358
        %v369 = vcombine.low %v365, %v366
        %371 = vst [vmem:[%s235] sm:$0x77] %v369
        %s372 = smul.u32 2, %s21
        %p373 = scmp.lt.s32.totalorder %s20, 1
        %s374 = scalar_select %p373, %s20, 1
        %p375 = scmp.lt.s32.totalorder %s372, 1
        %s376 = scalar_select %p375, %s372, 1
        %s377 = smul.addr %s374, 2
        %s378 = sadd.s32 %s376, %s377
        %s379 = smul.addr %s378, 4
        %s380 = scalar_lea.vmem %s3, %s379
        // Predicated region
        $region41: #{out_conv.1} parent=31 // pred_check
          %p381 = pneg %p118
        $region42: #{out_conv.1} parent=31 // pred_check_branch
          %383 = sbr.rel (%p381) target = $region44
        $region43: #{out_conv.1} parent=31 // pred_region
          %s384 = smul.u32 2, %s21
        $region44: #{out_conv.1} parent=31 // pred_fallthru
          _
      $region32: #{out_conv.1} parent=5 // pred_fallthru
        _
      %p385 = scmp.le.s32.totalorder 2, %s11
      // Predicated region
      $region45: #{out_conv.1} parent=5 // pred_check
        %p386 = pneg %p385
      $region46: #{out_conv.1} parent=5 // pred_check_branch
        %388 = sbr.rel (%p386) target = $region48
      $region47: #{out_conv.1} parent=5 // pred_region
        %s389 = ssub.s32 %s11, 2
        // Predicated region
        $region49: #{out_conv.1} parent=47 // pred_check
          %p390 = pneg %p124
        $region50: #{out_conv.1} parent=47 // pred_check_branch
          %392 = sbr.rel (%p390) target = $region52
        $region51: #{out_conv.1} parent=47 // pred_region
          %s393 = smul.u32 2, %s23
          %p394 = scmp.lt.s32.totalorder %s22, 1
          %s395 = scalar_select %p394, %s22, 1
          %p396 = scmp.lt.s32.totalorder %s393, 1
          %s397 = scalar_select %p396, %s393, 1
          %s398 = smul.addr %s395, 2
          %s399 = sadd.s32 %s397, %s398
          %s400 = smul.addr %s399, 4
          %s401 = scalar_lea.vmem %s3, %s400
        $region52: #{out_conv.1} parent=47 // pred_fallthru
          _
      $region48: #{out_conv.1} parent=5 // pred_fallthru
        _
    $region6: #{out_conv.1} parent=1 // loop_footer
      %s15 = sadd.s32 1, %s11
    $region7: #{out_conv.1} parent=1 // loop_footer_branch
      %10 = sbr.rel target = $region3
    $region8: #{out_conv.1} parent=1 // loop_exit
      _
    %402 = vsyncpa [#allocation3], 1
    %s403 = scalar_lea.sflag [#allocation3], 1
    %404 = vsyncpa %s403, 1
    %405 = vsyncpa [#allocation5], 1

</llo_original>
